<compile_context>
chip_gen: v5e
topology: v5e:2x2
jax: 0.10.0
libtpu: 0.0.40
codegen_flags: <defaults>
</compile_context>

<pallas_src>
import functools

import jax
import jax.numpy as jnp
from jax.experimental import pallas as pl
from jax.experimental.pallas import tpu as pltpu


def _round_up(x: int, m: int) -> int:
    return ((x + m - 1) // m) * m


def _dequant_kernel(x_ref, w_ref, o_ref, *, half_step):
    # In-kernel widen to bf16 (exact for {0,1} bits); f32 MXU accumulation.
    x = x_ref[...].astype(jnp.bfloat16)
    num = jnp.dot(x, w_ref[...], preferred_element_type=jnp.float32)
    # 1/2^B already folded into W; epilogue is a single add.
    o_ref[...] = (num + half_step).astype(o_ref.dtype)


def make_bit2num_block(tn: int, B: int) -> jnp.ndarray:
    """Diagonal block Wb[c*B + i, c] = 2**(-1-i)  (the 1/2^B fold included)."""
    pow2 = 2.0 ** (-1.0 - jnp.arange(B, dtype=jnp.float32))      # (B,)
    eye = jnp.eye(tn, dtype=jnp.float32)                         # (tn, tn)
    return (eye[:, None, :] * pow2[None, :, None]).reshape(tn * B, tn)


def dequantization_layer_pallas(x: jnp.ndarray, B: int, *, tm: int = 1024,
                                tn: int = 128,
                                out_dtype=jnp.float32) -> jnp.ndarray:
    """Pallas implementation of DequantizationLayer(B).forward(x).

    x: [batch, num_bits], values must be exactly {0, 1} (float/int/bool).
    returns: [batch, num_bits // B] in `out_dtype` (float32 by default;
             bfloat16 output is bit-exact for B <= 7).
    """
    batch, num_bits = x.shape
    assert num_bits % B == 0, "num_bits must be divisible by B"
    C = num_bits // B
    half_step = 0.5 / float(2 ** B)

    if x.dtype == jnp.bool_:                      # bool refs lower awkwardly; int8 is cheap
        x = x.astype(jnp.int8)

    # ---------------- column tiling -------------------------------------
    col_pad = 0
    w_bytes_full = (C * B) * C * 2                # bf16 W if we take the full-width tile
    if C * B <= 2048 and w_bytes_full <= 2 * 1024 * 1024:
        TN = C                                    # one contiguous full-width column tile
    elif C % tn == 0:
        TN = tn                                   # lane-dense 128-wide output tiles
    else:
        # Large ragged C: pad bit columns with zero bits so W stays a fixed
        # (tn*B, tn) tile (bounded VMEM on all gens, incl. v7x's 64 MiB).
        col_pad = _round_up(C, tn) - C
        x = jnp.pad(x, ((0, 0), (0, col_pad * B)))
        TN = tn
    C_p = C + col_pad
    n_col_tiles = C_p // TN

    # ---------------- batch tiling (partial final block, no wrapper pad) -
    itemsize_x = jnp.dtype(x.dtype).itemsize
    itemsize_o = jnp.dtype(out_dtype).itemsize
    per_row_bytes = TN * B * itemsize_x + TN * itemsize_o
    pipeline_budget = 12 * 1024 * 1024            # double-buffered x/out blocks
    tm_cap = max(32, (pipeline_budget // (2 * per_row_bytes)) // 32 * 32)
    TM = min(_round_up(tm, 32), tm_cap, _round_up(batch, 32))
    n_row_tiles = pl.cdiv(batch, TM)

    w_block = make_bit2num_block(TN, B).astype(jnp.bfloat16)     # tiny, VMEM-resident

    kernel = functools.partial(_dequant_kernel, half_step=half_step)

    out = pl.pallas_call(
        kernel,
        out_shape=jax.ShapeDtypeStruct((batch, C_p), out_dtype),
        grid_spec=pltpu.PrefetchScalarGridSpec(
            num_scalar_prefetch=0,
            grid=(n_row_tiles, n_col_tiles),       # batch leads: v7x's 2 TCs share it
            in_specs=[
                pl.BlockSpec((TM, TN * B), lambda i, j: (i, j)),   # x slab (native dtype)
                pl.BlockSpec((TN * B, TN), lambda i, j: (0, 0)),   # single diag W block
            ],
            out_specs=pl.BlockSpec((TM, TN), lambda i, j: (i, j)),
        ),
        compiler_params=pltpu.CompilerParams(
            dimension_semantics=("parallel", "parallel"),   # no reduction axis
            vmem_limit_bytes=32 * 1024 * 1024,
        ),
    )(x, w_block)

    return out[:, :C] if col_pad else out


def _reference(x: jnp.ndarray, B: int) -> jnp.ndarray:
    """Pure-JAX reference mirroring the PyTorch Bit2Num / Dequantization."""
    xf = x.astype(jnp.float32)
    batch, num_bits = xf.shape
    C = num_bits // B
    xr = xf.reshape(batch, C, B)
    pow2 = 2.0 ** (B - 1 - jnp.arange(B, dtype=jnp.float32))
    num = jnp.sum(xr * pow2[None, None, :], axis=-1)
    return (num + 0.5) / (2 ** B)


def dequantization_layer(x: jnp.ndarray, B: int) -> jnp.ndarray:
    """Dispatcher: tiny problems stay in fused XLA; larger ones use the kernel."""
    batch, num_bits = x.shape
    if batch * num_bits < (1 << 16):      # launch/grid-step overhead dominates here
        return _reference(x, B)
    return dequantization_layer_pallas(x, B)


if __name__ == "__main__":
    key = jax.random.PRNGKey(0)
    k0, k1, k2 = jax.random.split(key, 3)

    # Case 1: B=4 bits/value, C=128 values (num_bits=512), batch=128.
    # C*B <= 2048 -> single full-width column tile, 1-D grid over batch.
    B = 4
    C = 128
    num_bits = C * B
    batch = 128
    x = jax.random.bernoulli(k0, p=0.5, shape=(batch, num_bits)).astype(jnp.float32)
    out = jax.block_until_ready(dequantization_layer_pallas(x, B))
    assert out.shape == (batch, C)
    assert out.dtype == jnp.float32
    assert jnp.allclose(out, _reference(x, B), atol=1e-6, rtol=0)

    # Case 2: ragged batch (partial final row block; no wrapper pad/slice of x).
    x2 = jax.random.bernoulli(k1, p=0.5, shape=(50, num_bits)).astype(jnp.float32)
    out2 = jax.block_until_ready(dequantization_layer_pallas(x2, B))
    assert out2.shape == (50, C)
    assert jnp.allclose(out2, _reference(x2, B), atol=1e-6, rtol=0)

    # Case 3: non-multiple-of-128 column count (C=96, B=3) -> full-extent column tile.
    B3, C3 = 3, 96
    x3 = jax.random.bernoulli(k2, p=0.5, shape=(64, C3 * B3)).astype(jnp.float32)
    out3 = jax.block_until_ready(dequantization_layer_pallas(x3, B3))
    assert out3.shape == (64, C3)
    assert jnp.allclose(out3, _reference(x3, B3), atol=1e-6, rtol=0)

    print("KERNEL_OK")
</pallas_src>

<mosaic_0001>
module attributes {stable_mosaic.version = 11 : i64} {
  func.func @_dequant_kernel(%arg0: i32, %arg1: i32, %arg2: memref<128x512xf32, #tpu.memory_space<vmem>>, %arg3: memref<512x128xbf16, #tpu.memory_space<vmem>>, %arg4: memref<128x128xf32, #tpu.memory_space<vmem>>) attributes {dimension_semantics = [#tpu.dimension_semantics<parallel>, #tpu.dimension_semantics<parallel>], iteration_bounds = array<i64: 1, 1>, scalar_prefetch = 0 : i64, scratch_operands = 0 : i64, tpu.core_type = #tpu.core_type<tc>, window_params = [{transform_indices = @transform_0, window_bounds = array<i64: 128, 512>}, {pipeline_mode = #tpu.pipeline_mode<synchronous>, transform_indices = @transform_1, window_bounds = array<i64: 512, 128>}, {transform_indices = @transform_2, window_bounds = array<i64: 128, 128>}]} {
    %c0 = arith.constant 0 : index
    %c0_0 = arith.constant 0 : index
    %0 = vector.load %arg2[%c0, %c0_0] : memref<128x512xf32, #tpu.memory_space<vmem>>, vector<128x512xf32>
    %1 = arith.truncf %0 : vector<128x512xf32> to vector<128x512xbf16>
    %c0_1 = arith.constant 0 : index
    %c0_2 = arith.constant 0 : index
    %2 = vector.load %arg3[%c0_1, %c0_2] : memref<512x128xbf16, #tpu.memory_space<vmem>>, vector<512x128xbf16>
    %cst = arith.constant dense<0.000000e+00> : vector<128x128xf32>
    %3 = tpu.matmul %1, %2, %cst {dimension_numbers = #tpu.dot_dimension_numbers<[1], [0], [0], [1], [0, 0, 1, 1], [], []>} : vector<128x512xbf16>, vector<512x128xbf16>, vector<128x128xf32> -> vector<128x128xf32>
    %cst_3 = arith.constant 3.125000e-02 : f32
    %4 = vector.broadcast %cst_3 : f32 to vector<128x128xf32>
    %5 = arith.addf %3, %4 : vector<128x128xf32>
    %c0_4 = arith.constant 0 : index
    %c0_5 = arith.constant 0 : index
    %6 = vector.load %arg4[%c0_4, %c0_5] : memref<128x128xf32, #tpu.memory_space<vmem>>, vector<128x128xf32>
    tpu.vector_store %arg4[%c0_4, %c0_5], %5 {strides = array<i32>} : memref<128x128xf32, #tpu.memory_space<vmem>>, vector<128x128xf32>,
    return
  }
  func.func @transform_0(%arg0: i32, %arg1: i32) -> (i32, i32) {
    %c0_i32 = arith.constant 0 : i32
    return %arg0, %arg1 : i32, i32
  }
  func.func @transform_1(%arg0: i32, %arg1: i32) -> (i32, i32) {
    %c0_i32 = arith.constant 0 : i32
    %c0_i32_0 = arith.constant 0 : i32
    %c0_i32_1 = arith.constant 0 : i32
    return %c0_i32, %c0_i32_0 : i32, i32
  }
  func.func @transform_2(%arg0: i32, %arg1: i32) -> (i32, i32) {
    %c0_i32 = arith.constant 0 : i32
    return %arg0, %arg1 : i32, i32
  }
}

</mosaic_0001>

<llo_original>
// kernel: tpu_custom_call.1
$region0: #{tpu_custom_call.1}
  #allocation0 [shape = 'u32[]', space=smem, size = 0x4, offset = 0x4, fixed_abs, tag = 'smem constant byte address 0x4 - core index']
  #allocation1 [shape = 'u32[72,128]{1,0:T(1,128)}', space=vmem, size = 0x9000, scoped, tag = 'internal scratch']
  %s0 = inlined_call_operand.hbm [shape: f32[128,512], index: 0, kind: input, shape index: {}]
  %s1 = inlined_call_operand.hbm [shape: bf16[512,128], index: 1, kind: input, shape index: {}]
  %s2 = inlined_call_operand.hbm [shape: f32[128,128], index: 2, kind: output, shape index: {}]
  %s3 = sld [smem:[#allocation0]]
  $region26: #{tpu_custom_call.1} parent=0
    _
  %s5 = ssub.s32 1, %s3
  %s6 = scalar_select 0, %s5, %s3
  $region1: #{tpu_custom_call.1} parent=0
    #allocation2 [shape = 'u8[262144]{0}', space=vmem, size = 0x40000, scoped, tag = 'input window, operand 0, single buffered']
    #allocation3 [shape = 's32[1]{0}', space=sflag, size = 0x4, scoped, tag = 'scoped memory for tpu_custom_call.1']
    #allocation4 [shape = 's32[1]{0}', space=sflag, size = 0x4, scoped, tag = 'scoped memory for tpu_custom_call.1']
    #allocation5 [shape = 'u8[131072]{0}', space=vmem, size = 0x20000, scoped, tag = 'input window, operand 1, single buffered']
    #allocation6 [shape = 's32[1]{0}', space=sflag, size = 0x4, scoped, tag = 'scoped memory for tpu_custom_call.1']
    #allocation7 [shape = 'u8[65536]{0}', space=vmem, size = 0x10000, scoped, tag = 'output window, operand 0, single buffered']
    %7 = vsyncpa [#allocation3], 0
    %8 = vsyncpa [#allocation6], 0
    %9 = vsyncpa [#allocation4], 0
    // Predicated region
    $region2: #{tpu_custom_call.1} parent=1 // pred_check
      _
    $region3: #{tpu_custom_call.1} parent=1 // pred_check_branch
      %11 = sbr.rel (0) target = $region5
    $region4: #{tpu_custom_call.1} parent=1 // pred_region
      %13 = vsyncadd [#allocation3], 0
      %s14 = sshll.u32 %s0, 4
      %s15 = int_to_ptr.hbm [resolvable:$true] %s14
      %s16 = sshll.u32 [#allocation2], 4
      %s17 = int_to_ptr.vmem [resolvable:$true] %s16
      %22 = dma.hbm_to_vmem [thread:$0]  %s15, 8192, %s17, [#allocation3], 512, 512, 32
    $region5: #{tpu_custom_call.1} parent=1 // pred_fallthru
      _
    // Predicated region
    $region6: #{tpu_custom_call.1} parent=1 // pred_check
      _
    $region7: #{tpu_custom_call.1} parent=1 // pred_check_branch
      %24 = sbr.rel (0) target = $region9
    $region8: #{tpu_custom_call.1} parent=1 // pred_region
      %26 = vsyncadd [#allocation6], 0
      %s27 = sshll.u32 %s1, 4
      %s28 = int_to_ptr.hbm [resolvable:$true] %s27
      %s29 = sshll.u32 [#allocation5], 4
      %s30 = int_to_ptr.vmem [resolvable:$true] %s29
      %35 = dma.hbm_to_vmem [thread:$0]  %s28, 4096, %s30, [#allocation6], 64, 64, 4
    $region9: #{tpu_custom_call.1} parent=1 // pred_fallthru
      _
    // Predicated region
    $region10: #{tpu_custom_call.1} parent=1 // pred_check
      _
    $region11: #{tpu_custom_call.1} parent=1 // pred_check_branch
      %37 = sbr.rel (0) target = $region13
    $region12: #{tpu_custom_call.1} parent=1 // pred_region
      %39 = dma.done [#allocation3], 8192
    $region13: #{tpu_custom_call.1} parent=1 // pred_fallthru
      _
    // Predicated region
    $region14: #{tpu_custom_call.1} parent=1 // pred_check
      _
    $region15: #{tpu_custom_call.1} parent=1 // pred_check_branch
      %41 = sbr.rel (0) target = $region17
    $region16: #{tpu_custom_call.1} parent=1 // pred_region
      %43 = dma.done [#allocation6], 4096
    $region17: #{tpu_custom_call.1} parent=1 // pred_fallthru
      _
    %v44 = vld [vmem:[#allocation2] sm:$0xff]
    %v45 = vld [vmem:[#allocation2 + $0x8] sm:$0xff]
    %v46 = vld [vmem:[#allocation2 + $0x10] sm:$0xff]
    %v47 = vld [vmem:[#allocation2 + $0x18] sm:$0xff]
    %v48 = vld [vmem:[#allocation2 + $0x20] sm:$0xff]
    %v49 = vld [vmem:[#allocation2 + $0x28] sm:$0xff]
    %v50 = vld [vmem:[#allocation2 + $0x30] sm:$0xff]
    %v51 = vld [vmem:[#allocation2 + $0x38] sm:$0xff]
    %v52 = vld [vmem:[#allocation2 + $0x40] sm:$0xff]
    %v53 = vld [vmem:[#allocation2 + $0x48] sm:$0xff]
    %v54 = vld [vmem:[#allocation2 + $0x50] sm:$0xff]
    %v55 = vld [vmem:[#allocation2 + $0x58] sm:$0xff]
    %v56 = vld [vmem:[#allocation2 + $0x60] sm:$0xff]
    %v57 = vld [vmem:[#allocation2 + $0x68] sm:$0xff]
    %v58 = vld [vmem:[#allocation2 + $0x70] sm:$0xff]
    %v59 = vld [vmem:[#allocation2 + $0x78] sm:$0xff]
    %v60 = vld [vmem:[#allocation2 + $0x80] sm:$0xff]
    %v61 = vld [vmem:[#allocation2 + $0x88] sm:$0xff]
    %v62 = vld [vmem:[#allocation2 + $0x90] sm:$0xff]
    %v63 = vld [vmem:[#allocation2 + $0x98] sm:$0xff]
    %v64 = vld [vmem:[#allocation2 + $0xa0] sm:$0xff]
    %v65 = vld [vmem:[#allocation2 + $0xa8] sm:$0xff]
    %v66 = vld [vmem:[#allocation2 + $0xb0] sm:$0xff]
    %v67 = vld [vmem:[#allocation2 + $0xb8] sm:$0xff]
    %v68 = vld [vmem:[#allocation2 + $0xc0] sm:$0xff]
    %v69 = vld [vmem:[#allocation2 + $0xc8] sm:$0xff]
    %v70 = vld [vmem:[#allocation2 + $0xd0] sm:$0xff]
    %v71 = vld [vmem:[#allocation2 + $0xd8] sm:$0xff]
    %v72 = vld [vmem:[#allocation2 + $0xe0] sm:$0xff]
    %v73 = vld [vmem:[#allocation2 + $0xe8] sm:$0xff]
    %v74 = vld [vmem:[#allocation2 + $0xf0] sm:$0xff]
    %v75 = vld [vmem:[#allocation2 + $0xf8] sm:$0xff]
    %v76 = vld [vmem:[#allocation2 + $0x100] sm:$0xff]
    %v77 = vld [vmem:[#allocation2 + $0x108] sm:$0xff]
    %v78 = vld [vmem:[#allocation2 + $0x110] sm:$0xff]
    %v79 = vld [vmem:[#allocation2 + $0x118] sm:$0xff]
    %v80 = vld [vmem:[#allocation2 + $0x120] sm:$0xff]
    %v81 = vld [vmem:[#allocation2 + $0x128] sm:$0xff]
    %v82 = vld [vmem:[#allocation2 + $0x130] sm:$0xff]
    %v83 = vld [vmem:[#allocation2 + $0x138] sm:$0xff]
    %v84 = vld [vmem:[#allocation2 + $0x140] sm:$0xff]
    %v85 = vld [vmem:[#allocation2 + $0x148] sm:$0xff]
    %v86 = vld [vmem:[#allocation2 + $0x150] sm:$0xff]
    %v87 = vld [vmem:[#allocation2 + $0x158] sm:$0xff]
    %v88 = vld [vmem:[#allocation2 + $0x160] sm:$0xff]
    %v89 = vld [vmem:[#allocation2 + $0x168] sm:$0xff]
    %v90 = vld [vmem:[#allocation2 + $0x170] sm:$0xff]
    %v91 = vld [vmem:[#allocation2 + $0x178] sm:$0xff]
    %v92 = vld [vmem:[#allocation2 + $0x180] sm:$0xff]
    %v93 = vld [vmem:[#allocation2 + $0x188] sm:$0xff]
    %v94 = vld [vmem:[#allocation2 + $0x190] sm:$0xff]
    %v95 = vld [vmem:[#allocation2 + $0x198] sm:$0xff]
    %v96 = vld [vmem:[#allocation2 + $0x1a0] sm:$0xff]
    %v97 = vld [vmem:[#allocation2 + $0x1a8] sm:$0xff]
    %v98 = vld [vmem:[#allocation2 + $0x1b0] sm:$0xff]
    %v99 = vld [vmem:[#allocation2 + $0x1b8] sm:$0xff]
    %v100 = vld [vmem:[#allocation2 + $0x1c0] sm:$0xff]
    %v101 = vld [vmem:[#allocation2 + $0x1c8] sm:$0xff]
    %v102 = vld [vmem:[#allocation2 + $0x1d0] sm:$0xff]
    %v103 = vld [vmem:[#allocation2 + $0x1d8] sm:$0xff]
    %v104 = vld [vmem:[#allocation2 + $0x1e0] sm:$0xff]
    %v105 = vld [vmem:[#allocation2 + $0x1e8] sm:$0xff]
    %v106 = vld [vmem:[#allocation2 + $0x1f0] sm:$0xff]
    %v107 = vld [vmem:[#allocation2 + $0x1f8] sm:$0xff]
    %v108 = vpack.c.bf16 %v48, %v44
    %v109 = vpack.c.bf16 %v49, %v45
    %v110 = vpack.c.bf16 %v50, %v46
    %v111 = vpack.c.bf16 %v51, %v47
    %v112 = vpack.c.bf16 %v56, %v52
    %v113 = vpack.c.bf16 %v57, %v53
    %v114 = vpack.c.bf16 %v58, %v54
    %v115 = vpack.c.bf16 %v59, %v55
    %v116 = vpack.c.bf16 %v64, %v60
    %v117 = vpack.c.bf16 %v65, %v61
    %v118 = vpack.c.bf16 %v66, %v62
    %v119 = vpack.c.bf16 %v67, %v63
    %v120 = vpack.c.bf16 %v72, %v68
    %v121 = vpack.c.bf16 %v73, %v69
    %v122 = vpack.c.bf16 %v74, %v70
    %v123 = vpack.c.bf16 %v75, %v71
    %v124 = vpack.c.bf16 %v80, %v76
    %v125 = vpack.c.bf16 %v81, %v77
    %v126 = vpack.c.bf16 %v82, %v78
    %v127 = vpack.c.bf16 %v83, %v79
    %v128 = vpack.c.bf16 %v88, %v84
    %v129 = vpack.c.bf16 %v89, %v85
    %v130 = vpack.c.bf16 %v90, %v86
    %v131 = vpack.c.bf16 %v91, %v87
    %v132 = vpack.c.bf16 %v96, %v92
    %v133 = vpack.c.bf16 %v97, %v93
    %v134 = vpack.c.bf16 %v98, %v94
    %v135 = vpack.c.bf16 %v99, %v95
    %v136 = vpack.c.bf16 %v104, %v100
    %v137 = vpack.c.bf16 %v105, %v101
    %v138 = vpack.c.bf16 %v106, %v102
    %v139 = vpack.c.bf16 %v107, %v103
    %v140 = vld [vmem:[#allocation5] sm:$0xf]
    %v141 = vld [vmem:[#allocation5 + $0x4] sm:$0xf]
    %v142 = vld [vmem:[#allocation5 + $0x8] sm:$0xf]
    %v143 = vld [vmem:[#allocation5 + $0xc] sm:$0xf]
    %v144 = vld [vmem:[#allocation5 + $0x10] sm:$0xf]
    %v145 = vld [vmem:[#allocation5 + $0x14] sm:$0xf]
    %v146 = vld [vmem:[#allocation5 + $0x18] sm:$0xf]
    %v147 = vld [vmem:[#allocation5 + $0x1c] sm:$0xf]
    %v148 = vld [vmem:[#allocation5 + $0x20] sm:$0xf]
    %v149 = vld [vmem:[#allocation5 + $0x24] sm:$0xf]
    %v150 = vld [vmem:[#allocation5 + $0x28] sm:$0xf]
    %v151 = vld [vmem:[#allocation5 + $0x2c] sm:$0xf]
    %v152 = vld [vmem:[#allocation5 + $0x30] sm:$0xf]
    %v153 = vld [vmem:[#allocation5 + $0x34] sm:$0xf]
    %v154 = vld [vmem:[#allocation5 + $0x38] sm:$0xf]
    %v155 = vld [vmem:[#allocation5 + $0x3c] sm:$0xf]
    %v156 = vld [vmem:[#allocation5 + $0x40] sm:$0xf]
    %v157 = vld [vmem:[#allocation5 + $0x44] sm:$0xf]
    %v158 = vld [vmem:[#allocation5 + $0x48] sm:$0xf]
    %v159 = vld [vmem:[#allocation5 + $0x4c] sm:$0xf]
    %v160 = vld [vmem:[#allocation5 + $0x50] sm:$0xf]
    %v161 = vld [vmem:[#allocation5 + $0x54] sm:$0xf]
    %v162 = vld [vmem:[#allocation5 + $0x58] sm:$0xf]
    %v163 = vld [vmem:[#allocation5 + $0x5c] sm:$0xf]
    %v164 = vld [vmem:[#allocation5 + $0x60] sm:$0xf]
    %v165 = vld [vmem:[#allocation5 + $0x64] sm:$0xf]
    %v166 = vld [vmem:[#allocation5 + $0x68] sm:$0xf]
    %v167 = vld [vmem:[#allocation5 + $0x6c] sm:$0xf]
    %v168 = vld [vmem:[#allocation5 + $0x70] sm:$0xf]
    %v169 = vld [vmem:[#allocation5 + $0x74] sm:$0xf]
    %v170 = vld [vmem:[#allocation5 + $0x78] sm:$0xf]
    %v171 = vld [vmem:[#allocation5 + $0x7c] sm:$0xf]
    %v172 = vld [vmem:[#allocation5 + $0x80] sm:$0xf]
    %v173 = vld [vmem:[#allocation5 + $0x84] sm:$0xf]
    %v174 = vld [vmem:[#allocation5 + $0x88] sm:$0xf]
    %v175 = vld [vmem:[#allocation5 + $0x8c] sm:$0xf]
    %v176 = vld [vmem:[#allocation5 + $0x90] sm:$0xf]
    %v177 = vld [vmem:[#allocation5 + $0x94] sm:$0xf]
    %v178 = vld [vmem:[#allocation5 + $0x98] sm:$0xf]
    %v179 = vld [vmem:[#allocation5 + $0x9c] sm:$0xf]
    %v180 = vld [vmem:[#allocation5 + $0xa0] sm:$0xf]
    %v181 = vld [vmem:[#allocation5 + $0xa4] sm:$0xf]
    %v182 = vld [vmem:[#allocation5 + $0xa8] sm:$0xf]
    %v183 = vld [vmem:[#allocation5 + $0xac] sm:$0xf]
    %v184 = vld [vmem:[#allocation5 + $0xb0] sm:$0xf]
    %v185 = vld [vmem:[#allocation5 + $0xb4] sm:$0xf]
    %v186 = vld [vmem:[#allocation5 + $0xb8] sm:$0xf]
    %v187 = vld [vmem:[#allocation5 + $0xbc] sm:$0xf]
    %v188 = vld [vmem:[#allocation5 + $0xc0] sm:$0xf]
    %v189 = vld [vmem:[#allocation5 + $0xc4] sm:$0xf]
    %v190 = vld [vmem:[#allocation5 + $0xc8] sm:$0xf]
    %v191 = vld [vmem:[#allocation5 + $0xcc] sm:$0xf]
    %v192 = vld [vmem:[#allocation5 + $0xd0] sm:$0xf]
    %v193 = vld [vmem:[#allocation5 + $0xd4] sm:$0xf]
    %v194 = vld [vmem:[#allocation5 + $0xd8] sm:$0xf]
    %v195 = vld [vmem:[#allocation5 + $0xdc] sm:$0xf]
    %v196 = vld [vmem:[#allocation5 + $0xe0] sm:$0xf]
    %v197 = vld [vmem:[#allocation5 + $0xe4] sm:$0xf]
    %v198 = vld [vmem:[#allocation5 + $0xe8] sm:$0xf]
    %v199 = vld [vmem:[#allocation5 + $0xec] sm:$0xf]
    %v200 = vld [vmem:[#allocation5 + $0xf0] sm:$0xf]
    %v201 = vld [vmem:[#allocation5 + $0xf4] sm:$0xf]
    %v202 = vld [vmem:[#allocation5 + $0xf8] sm:$0xf]
    %v203 = vld [vmem:[#allocation5 + $0xfc] sm:$0xf]
    %v268 = vunpack.c.l.b16 %v140
    %v269 = vunpack.c.l.b16 %v141
    %v270 = vunpack.c.l.b16 %v142
    %v271 = vunpack.c.l.b16 %v143
    %v272 = vunpack.c.l.b16 %v144
    %v273 = vunpack.c.l.b16 %v145
    %v274 = vunpack.c.l.b16 %v146
    %v275 = vunpack.c.l.b16 %v147
    %v276 = vunpack.c.l.b16 %v148
    %v277 = vunpack.c.l.b16 %v149
    %v278 = vunpack.c.l.b16 %v150
    %v279 = vunpack.c.l.b16 %v151
    %v280 = vunpack.c.l.b16 %v152
    %v281 = vunpack.c.l.b16 %v153
    %v282 = vunpack.c.l.b16 %v154
    %v283 = vunpack.c.l.b16 %v155
    %v284 = vunpack.c.l.b16 %v156
    %v285 = vunpack.c.l.b16 %v157
    %v286 = vunpack.c.l.b16 %v158
    %v287 = vunpack.c.l.b16 %v159
    %v288 = vunpack.c.l.b16 %v160
    %v289 = vunpack.c.l.b16 %v161
    %v290 = vunpack.c.l.b16 %v162
    %v291 = vunpack.c.l.b16 %v163
    %v292 = vunpack.c.l.b16 %v164
    %v293 = vunpack.c.l.b16 %v165
    %v294 = vunpack.c.l.b16 %v166
    %v295 = vunpack.c.l.b16 %v167
    %v296 = vunpack.c.l.b16 %v168
    %v297 = vunpack.c.l.b16 %v169
    %v298 = vunpack.c.l.b16 %v170
    %v299 = vunpack.c.l.b16 %v171
    %v300 = vunpack.c.l.b16 %v172
    %v301 = vunpack.c.l.b16 %v173
    %v302 = vunpack.c.l.b16 %v174
    %v303 = vunpack.c.l.b16 %v175
    %v304 = vunpack.c.l.b16 %v176
    %v305 = vunpack.c.l.b16 %v177
    %v306 = vunpack.c.l.b16 %v178
    %v307 = vunpack.c.l.b16 %v179
    %v308 = vunpack.c.l.b16 %v180
    %v309 = vunpack.c.l.b16 %v181
    %v310 = vunpack.c.l.b16 %v182
    %v311 = vunpack.c.l.b16 %v183
    %v312 = vunpack.c.l.b16 %v184
    %v313 = vunpack.c.l.b16 %v185
    %v314 = vunpack.c.l.b16 %v186
    %v315 = vunpack.c.l.b16 %v187
    %v316 = vunpack.c.l.b16 %v188
    %v317 = vunpack.c.l.b16 %v189
    %v318 = vunpack.c.l.b16 %v190
    %v319 = vunpack.c.l.b16 %v191
    %v320 = vunpack.c.l.b16 %v192
    %v321 = vunpack.c.l.b16 %v193
    %v322 = vunpack.c.l.b16 %v194
    %v323 = vunpack.c.l.b16 %v195
    %v324 = vunpack.c.l.b16 %v196
    %v325 = vunpack.c.l.b16 %v197
    %v326 = vunpack.c.l.b16 %v198
    %v327 = vunpack.c.l.b16 %v199
    %v328 = vunpack.c.l.b16 %v200
    %v329 = vunpack.c.l.b16 %v201
    %v330 = vunpack.c.l.b16 %v202
    %v331 = vunpack.c.l.b16 %v203
    %v332 = vpack.c.b16 %v269, %v268
    %v333 = vpack.c.b16 %v271, %v270
    %v334 = vpack.c.b16 %v273, %v272
    %v335 = vpack.c.b16 %v275, %v274
    %v336 = vpack.c.b16 %v277, %v276
    %v337 = vpack.c.b16 %v279, %v278
    %v338 = vpack.c.b16 %v281, %v280
    %v339 = vpack.c.b16 %v283, %v282
    %v340 = vpack.c.b16 %v285, %v284
    %v341 = vpack.c.b16 %v287, %v286
    %v342 = vpack.c.b16 %v289, %v288
    %v343 = vpack.c.b16 %v291, %v290
    %v344 = vpack.c.b16 %v293, %v292
    %v345 = vpack.c.b16 %v295, %v294
    %v346 = vpack.c.b16 %v297, %v296
    %v347 = vpack.c.b16 %v299, %v298
    %v348 = vpack.c.b16 %v301, %v300
    %v349 = vpack.c.b16 %v303, %v302
    %v350 = vpack.c.b16 %v305, %v304
    %v351 = vpack.c.b16 %v307, %v306
    %v352 = vpack.c.b16 %v309, %v308
    %v353 = vpack.c.b16 %v311, %v310
    %v354 = vpack.c.b16 %v313, %v312
    %v355 = vpack.c.b16 %v315, %v314
    %v356 = vpack.c.b16 %v317, %v316
    %v357 = vpack.c.b16 %v319, %v318
    %v358 = vpack.c.b16 %v321, %v320
    %v359 = vpack.c.b16 %v323, %v322
    %v360 = vpack.c.b16 %v325, %v324
    %v361 = vpack.c.b16 %v327, %v326
    %v362 = vpack.c.b16 %v329, %v328
    %v363 = vpack.c.b16 %v331, %v330
    %396 = vmatpush.bf16.msra.mxu0 %v339
    %397 = vmatpush.bf16.msra.mxu0 %v338
    %398 = vmatpush.bf16.msra.mxu0 %v337
    %399 = vmatpush.bf16.msra.mxu0 %v336
    %400 = vmatpush.bf16.msra.mxu0 %v335
    %401 = vmatpush.bf16.msra.mxu0 %v334
    %402 = vmatpush.bf16.msra.mxu0 %v333
    %403 = vmatpush.bf16.msra.mxu0 %v332
    %404 = vmatmul.bf16.gmra.mxu0 %v108
    %v405 = vpop.f32.mrf.mxu0
    %v406 = vadd.f32 0.03125, %v405
    %v407 = vpop.f32.mrf.mxu0
    %v408 = vadd.f32 0.03125, %v407
    %409 = vmatmul.bf16.gmra.mxu0 %v112
    %v410 = vpop.f32.mrf.mxu0
    %v411 = vadd.f32 0.03125, %v410
    %v412 = vpop.f32.mrf.mxu0
    %v413 = vadd.f32 0.03125, %v412
    %414 = vmatmul.bf16.gmra.mxu0 %v116
    %v415 = vpop.f32.mrf.mxu0
    %v416 = vadd.f32 0.03125, %v415
    %v417 = vpop.f32.mrf.mxu0
    %v418 = vadd.f32 0.03125, %v417
    %419 = vmatmul.bf16.gmra.mxu0 %v120
    %v420 = vpop.f32.mrf.mxu0
    %v421 = vadd.f32 0.03125, %v420
    %v422 = vpop.f32.mrf.mxu0
    %v423 = vadd.f32 0.03125, %v422
    %424 = vmatmul.bf16.gmra.mxu0 %v124
    %v425 = vpop.f32.mrf.mxu0
    %v426 = vadd.f32 0.03125, %v425
    %v427 = vpop.f32.mrf.mxu0
    %v428 = vadd.f32 0.03125, %v427
    %429 = vmatmul.bf16.gmra.mxu0 %v128
    %v430 = vpop.f32.mrf.mxu0
    %v431 = vadd.f32 0.03125, %v430
    %v432 = vpop.f32.mrf.mxu0
    %v433 = vadd.f32 0.03125, %v432
    %434 = vmatmul.bf16.gmra.mxu0 %v132
    %v435 = vpop.f32.mrf.mxu0
    %v436 = vadd.f32 0.03125, %v435
    %v437 = vpop.f32.mrf.mxu0
    %v438 = vadd.f32 0.03125, %v437
    %439 = vmatmul.bf16.gmra.mxu0 %v136
    %v440 = vpop.f32.mrf.mxu0
    %v441 = vadd.f32 0.03125, %v440
    %v442 = vpop.f32.mrf.mxu0
    %v443 = vadd.f32 0.03125, %v442
    %444 = vdwg.mxu0
    %445 = vmatpush.bf16.msra.mxu0 %v347
    %446 = vmatpush.bf16.msra.mxu0 %v346
    %447 = vmatpush.bf16.msra.mxu0 %v345
    %448 = vmatpush.bf16.msra.mxu0 %v344
    %449 = vmatpush.bf16.msra.mxu0 %v343
    %450 = vmatpush.bf16.msra.mxu0 %v342
    %451 = vmatpush.bf16.msra.mxu0 %v341
    %452 = vmatpush.bf16.msra.mxu0 %v340
    %453 = vmatmul.bf16.gmra.mxu0 %v109
    %v454 = vpop.f32.mrf.mxu0
    %v455 = vadd.f32 %v406, %v454
    %v456 = vpop.f32.mrf.mxu0
    %v457 = vadd.f32 %v408, %v456
    %458 = vmatmul.bf16.gmra.mxu0 %v113
    %v459 = vpop.f32.mrf.mxu0
    %v460 = vadd.f32 %v411, %v459
    %v461 = vpop.f32.mrf.mxu0
    %v462 = vadd.f32 %v413, %v461
    %463 = vmatmul.bf16.gmra.mxu0 %v117
    %v464 = vpop.f32.mrf.mxu0
    %v465 = vadd.f32 %v416, %v464
    %v466 = vpop.f32.mrf.mxu0
    %v467 = vadd.f32 %v418, %v466
    %468 = vmatmul.bf16.gmra.mxu0 %v121
    %v469 = vpop.f32.mrf.mxu0
    %v470 = vadd.f32 %v421, %v469
    %v471 = vpop.f32.mrf.mxu0
    %v472 = vadd.f32 %v423, %v471
    %473 = vmatmul.bf16.gmra.mxu0 %v125
    %v474 = vpop.f32.mrf.mxu0
    %v475 = vadd.f32 %v426, %v474
    %v476 = vpop.f32.mrf.mxu0
    %v477 = vadd.f32 %v428, %v476
    %478 = vmatmul.bf16.gmra.mxu0 %v129
    %v479 = vpop.f32.mrf.mxu0
    %v480 = vadd.f32 %v431, %v479
    %v481 = vpop.f32.mrf.mxu0
    %v482 = vadd.f32 %v433, %v481
    %483 = vmatmul.bf16.gmra.mxu0 %v133
    %v484 = vpop.f32.mrf.mxu0
    %v485 = vadd.f32 %v436, %v484
    %v486 = vpop.f32.mrf.mxu0
    %v487 = vadd.f32 %v438, %v486
    %488 = vmatmul.bf16.gmra.mxu0 %v137
    %v489 = vpop.f32.mrf.mxu0
    %v490 = vadd.f32 %v441, %v489
    %v491 = vpop.f32.mrf.mxu0
    %v492 = vadd.f32 %v443, %v491
    %493 = vdwg.mxu0
    %494 = vmatpush.bf16.msra.mxu0 %v355
    %495 = vmatpush.bf16.msra.mxu0 %v354
    %496 = vmatpush.bf16.msra.mxu0 %v353
    %497 = vmatpush.bf16.msra.mxu0 %v352
    %498 = vmatpush.bf16.msra.mxu0 %v351
    %499 = vmatpush.bf16.msra.mxu0 %v350
    %500 = vmatpush.bf16.msra.mxu0 %v349
    %501 = vmatpush.bf16.msra.mxu0 %v348
    %502 = vmatmul.bf16.gmra.mxu0 %v110
    %v503 = vpop.f32.mrf.mxu0
    %v504 = vadd.f32 %v455, %v503
    %v505 = vpop.f32.mrf.mxu0
    %v506 = vadd.f32 %v457, %v505
    %507 = vmatmul.bf16.gmra.mxu0 %v114
    %v508 = vpop.f32.mrf.mxu0
    %v509 = vadd.f32 %v460, %v508
    %v510 = vpop.f32.mrf.mxu0
    %v511 = vadd.f32 %v462, %v510
    %512 = vmatmul.bf16.gmra.mxu0 %v118
    %v513 = vpop.f32.mrf.mxu0
    %v514 = vadd.f32 %v465, %v513
    %v515 = vpop.f32.mrf.mxu0
    %v516 = vadd.f32 %v467, %v515
    %517 = vmatmul.bf16.gmra.mxu0 %v122
    %v518 = vpop.f32.mrf.mxu0
    %v519 = vadd.f32 %v470, %v518
    %v520 = vpop.f32.mrf.mxu0
    %v521 = vadd.f32 %v472, %v520
    %522 = vmatmul.bf16.gmra.mxu0 %v126
    %v523 = vpop.f32.mrf.mxu0
    %v524 = vadd.f32 %v475, %v523
    %v525 = vpop.f32.mrf.mxu0
    %v526 = vadd.f32 %v477, %v525
    %527 = vmatmul.bf16.gmra.mxu0 %v130
    %v528 = vpop.f32.mrf.mxu0
    %v529 = vadd.f32 %v480, %v528
    %v530 = vpop.f32.mrf.mxu0
    %v531 = vadd.f32 %v482, %v530
    %532 = vmatmul.bf16.gmra.mxu0 %v134
    %v533 = vpop.f32.mrf.mxu0
    %v534 = vadd.f32 %v485, %v533
    %v535 = vpop.f32.mrf.mxu0
    %v536 = vadd.f32 %v487, %v535
    %537 = vmatmul.bf16.gmra.mxu0 %v138
    %v538 = vpop.f32.mrf.mxu0
    %v539 = vadd.f32 %v490, %v538
    %v540 = vpop.f32.mrf.mxu0
    %v541 = vadd.f32 %v492, %v540
    %542 = vdwg.mxu0
    %543 = vmatpush.bf16.msra.mxu0 %v363
    %544 = vmatpush.bf16.msra.mxu0 %v362
    %545 = vmatpush.bf16.msra.mxu0 %v361
    %546 = vmatpush.bf16.msra.mxu0 %v360
    %547 = vmatpush.bf16.msra.mxu0 %v359
    %548 = vmatpush.bf16.msra.mxu0 %v358
    %549 = vmatpush.bf16.msra.mxu0 %v357
    %550 = vmatpush.bf16.msra.mxu0 %v356
    %551 = vmatmul.bf16.gmra.mxu0 %v111
    %v552 = vpop.f32.mrf.mxu0
    %v553 = vadd.f32 %v504, %v552
    %v554 = vpop.f32.mrf.mxu0
    %v555 = vadd.f32 %v506, %v554
    %556 = vmatmul.bf16.gmra.mxu0 %v115
    %v557 = vpop.f32.mrf.mxu0
    %v558 = vadd.f32 %v509, %v557
    %v559 = vpop.f32.mrf.mxu0
    %v560 = vadd.f32 %v511, %v559
    %561 = vmatmul.bf16.gmra.mxu0 %v119
    %v562 = vpop.f32.mrf.mxu0
    %v563 = vadd.f32 %v514, %v562
    %v564 = vpop.f32.mrf.mxu0
    %v565 = vadd.f32 %v516, %v564
    %566 = vmatmul.bf16.gmra.mxu0 %v123
    %v567 = vpop.f32.mrf.mxu0
    %v568 = vadd.f32 %v519, %v567
    %v569 = vpop.f32.mrf.mxu0
    %v570 = vadd.f32 %v521, %v569
    %571 = vmatmul.bf16.gmra.mxu0 %v127
    %v572 = vpop.f32.mrf.mxu0
    %v573 = vadd.f32 %v524, %v572
    %v574 = vpop.f32.mrf.mxu0
    %v575 = vadd.f32 %v526, %v574
    %576 = vmatmul.bf16.gmra.mxu0 %v131
    %v577 = vpop.f32.mrf.mxu0
    %v578 = vadd.f32 %v529, %v577
    %v579 = vpop.f32.mrf.mxu0
    %v580 = vadd.f32 %v531, %v579
    %581 = vmatmul.bf16.gmra.mxu0 %v135
    %v582 = vpop.f32.mrf.mxu0
    %v583 = vadd.f32 %v534, %v582
    %v584 = vpop.f32.mrf.mxu0
    %v585 = vadd.f32 %v536, %v584
    %586 = vmatmul.bf16.gmra.mxu0 %v139
    %v587 = vpop.f32.mrf.mxu0
    %v588 = vadd.f32 %v539, %v587
    %v589 = vpop.f32.mrf.mxu0
    %v590 = vadd.f32 %v541, %v589
    %591 = vdwg.mxu0
    %592 = vst [vmem:[#allocation7] sm:$0xff] %v553
    %593 = vst [vmem:[#allocation7 + $0x8] sm:$0xff] %v555
    %594 = vst [vmem:[#allocation7 + $0x10] sm:$0xff] %v558
    %595 = vst [vmem:[#allocation7 + $0x18] sm:$0xff] %v560
    %596 = vst [vmem:[#allocation7 + $0x20] sm:$0xff] %v563
    %597 = vst [vmem:[#allocation7 + $0x28] sm:$0xff] %v565
    %598 = vst [vmem:[#allocation7 + $0x30] sm:$0xff] %v568
    %599 = vst [vmem:[#allocation7 + $0x38] sm:$0xff] %v570
    %600 = vst [vmem:[#allocation7 + $0x40] sm:$0xff] %v573
    %601 = vst [vmem:[#allocation7 + $0x48] sm:$0xff] %v575
    %602 = vst [vmem:[#allocation7 + $0x50] sm:$0xff] %v578
    %603 = vst [vmem:[#allocation7 + $0x58] sm:$0xff] %v580
    %604 = vst [vmem:[#allocation7 + $0x60] sm:$0xff] %v583
    %605 = vst [vmem:[#allocation7 + $0x68] sm:$0xff] %v585
    %606 = vst [vmem:[#allocation7 + $0x70] sm:$0xff] %v588
    %607 = vst [vmem:[#allocation7 + $0x78] sm:$0xff] %v590
    // Predicated region
    $region18: #{tpu_custom_call.1} parent=1 // pred_check
      _
    $region19: #{tpu_custom_call.1} parent=1 // pred_check_branch
      %609 = sbr.rel (0) target = $region21
    $region20: #{tpu_custom_call.1} parent=1 // pred_region
      %611 = vsyncadd [#allocation4], 0
      %s612 = sshll.u32 [#allocation7], 4
      %s613 = int_to_ptr.vmem [resolvable:$true] %s612
      %s614 = sshll.u32 %s2, 4
      %s615 = int_to_ptr.hbm [resolvable:$true] %s614
      %620 = dma.vmem_to_hbm [thread:$0]  %s613, 2048, %s615, [#allocation4], 128, 128, 8
    $region21: #{tpu_custom_call.1} parent=1 // pred_fallthru
      _
    // Predicated region
    $region22: #{tpu_custom_call.1} parent=1 // pred_check
      _
    $region23: #{tpu_custom_call.1} parent=1 // pred_check_branch
      %622 = sbr.rel (0) target = $region25
    $region24: #{tpu_custom_call.1} parent=1 // pred_region
      %624 = dma.done [#allocation4], 2048
    $region25: #{tpu_custom_call.1} parent=1 // pred_fallthru
      _
    %625 = vsyncpa [#allocation3], 1
    %626 = vsyncpa [#allocation6], 1
    %627 = vsyncpa [#allocation4], 1

</llo_original>
